<compile_context>
chip_gen: v7x
topology: tpu7x:2x2x1
jax: 0.10.0
libtpu: 0.0.40
codegen_flags: <defaults>
</compile_context>

<pallas_src>
import functools

import jax
import jax.numpy as jnp
import numpy as np
from jax.experimental import pallas as pl
from jax.experimental.pallas import tpu as pltpu

# "Parameters" of the module (set deterministically in __init__, no weights).
ANCHOR_SIZES = (64.0, 256.0, 512.0)
ASPECT_RATIOS = (0.5, 1.0, 2.0)

_LANE = 128      # TPU lane width
_SUBLANE = 8     # TPU sublane count for f32


def _round_up(x, m):
    return ((x + m - 1) // m) * m


# ---------------------------------------------------------------------------
# Trace-time (numpy) constant setup — shape-only, no device ops.
# ---------------------------------------------------------------------------
def _base_anchors_np(anchor_sizes, aspect_ratios):
    sizes = np.asarray(anchor_sizes, dtype=np.float32)
    ratios = np.asarray(aspect_ratios, dtype=np.float32)
    h_ratios = np.sqrt(ratios)
    w_ratios = np.float32(1.0) / h_ratios
    hs = (h_ratios[:, None] * sizes[None, :]).reshape(-1)
    ws = (w_ratios[:, None] * sizes[None, :]).reshape(-1)
    base = np.round(np.stack([-hs, -ws, hs, ws], axis=1) / 2.0).astype(np.float32)
    return base  # (A, 4)


def _shift_cols_np(fh, fw, img_h, img_w):
    """Grid-center shifts pre-scrambled into PyTorch's
    stack(dim=0).view(-1,1,4) order, laid out lane-dense as (4, n) with
    n = fh*fw: shift_cols[c, i] == flat[4*i + c], flat = [h_c, w_c, h_c, w_c]."""
    sh = np.float32(img_h / fh)
    sw = np.float32(img_w / fw)
    h_c = np.repeat(np.arange(fh, dtype=np.float32) * sh, fw)   # (n,)
    w_c = np.tile(np.arange(fw, dtype=np.float32) * sw, fh)     # (n,)
    flat = np.concatenate([h_c, w_c, h_c, w_c])                 # (4n,)
    n = fh * fw
    return flat.reshape(n, 4).T.copy(), n                       # (4, n)


def _choose_lane_tile(total):
    # Largest lane tile while keeping >=2 grid steps when possible (so v7x's
    # two TensorCores both get work).  (40, 8192) f32 out block ~= 1.3 MiB,
    # ~2.6 MiB double-buffered -> far under every chip's VMEM budget.
    for t in (8192, 4096, 2048, 1024, 512, 256):
        if total >= 2 * t:
            return t
    return _LANE


# ---------------------------------------------------------------------------
# Pallas kernel: lane-dense, full 8-sublane-group broadcast add.
#   shift_ref: (8, T)   scrambled grid-center columns (rows 0-3 == rows 4-7)
#   base_ref : (40, 1)  flattened base anchors (rows 36..39 zero padding),
#                       constant index_map -> fetched once.
#   out_ref  : (40, T)  out[8g + r, i] = shift[r, i] + base[8g + r]
# ---------------------------------------------------------------------------
def _anchor_add_kernel(shift_ref, base_ref, out_ref, *, num_groups):
    s8 = shift_ref[...]                                  # (8, T) full vregs
    for g in range(num_groups):                          # static unroll (5)
        r0 = _SUBLANE * g
        out_ref[pl.ds(r0, _SUBLANE), :] = s8 + base_ref[pl.ds(r0, _SUBLANE), :]


# ---------------------------------------------------------------------------
# Jitted device path: pallas_call + per-level un-scramble (fused epilogue).
# ---------------------------------------------------------------------------
@functools.partial(
    jax.jit,
    static_argnames=("num_anchors", "lane_tile", "level_meta",
                     "anchor_sizes", "aspect_ratios"))
def _anchor_forward(shift8, *, num_anchors, lane_tile, level_meta,
                    anchor_sizes, aspect_ratios):
    rows = num_anchors * 4                               # 36
    rows_pad = _round_up(rows, _SUBLANE)                 # 40
    total_pad = shift8.shape[1]
    num_tiles = total_pad // lane_tile

    base = _base_anchors_np(anchor_sizes, aspect_ratios)  # (A, 4) numpy const
    base_col = np.zeros((rows_pad, 1), dtype=np.float32)
    base_col[:rows, 0] = base.reshape(-1)

    kernel = functools.partial(_anchor_add_kernel,
                               num_groups=rows_pad // _SUBLANE)
    out = pl.pallas_call(
        kernel,
        out_shape=jax.ShapeDtypeStruct((rows_pad, total_pad), jnp.float32),
        grid_spec=pltpu.PrefetchScalarGridSpec(
            num_scalar_prefetch=0,
            grid=(num_tiles,),
            in_specs=[
                pl.BlockSpec((_SUBLANE, lane_tile), lambda i: (0, i)),
                pl.BlockSpec((rows_pad, 1), lambda i: (0, 0)),
            ],
            out_specs=pl.BlockSpec((rows_pad, lane_tile), lambda i: (0, i)),
        ),
        compiler_params=pltpu.CompilerParams(
            dimension_semantics=("parallel",)),
    )(shift8, jnp.asarray(base_col))

    # Un-scramble back to the PyTorch (n*A, 4) row layout.  Level offsets are
    # 128-aligned; rows are sliced back to 36 before the transpose so no
    # padded pseudo-anchors leak out.  Fused with the kernel under this jit.
    results = []
    for n, off in level_meta:
        lvl = out[:rows, off:off + n]                           # (36, n)
        lvl = lvl.reshape(num_anchors, 4, n).transpose(2, 0, 1)  # (n, A, 4)
        results.append(lvl.reshape(n * num_anchors, 4))
    return tuple(results)


# ---------------------------------------------------------------------------
# Module forward.
# ---------------------------------------------------------------------------
def anchor_generator(imgs, feature_maps,
                     anchor_sizes=ANCHOR_SIZES, aspect_ratios=ASPECT_RATIOS):
    """Forward pass of Anchor_generator. Returns a list of (n_i*A, 4) arrays."""
    img_h, img_w = (int(d) for d in imgs.shape[-2:])
    feat_hw = [tuple(int(d) for d in fm.shape[-2:]) for fm in feature_maps]
    num_anchors = len(anchor_sizes) * len(aspect_ratios)

    # Fuse all levels into one lane-dense slab; pad each level to a multiple
    # of 128 lanes so per-level extraction starts 128-aligned.
    cols, level_meta, off = [], [], 0
    for fh, fw in feat_hw:
        sc, n = _shift_cols_np(fh, fw, img_h, img_w)      # (4, n)
        n_pad = _round_up(n, _LANE)
        sc_pad = np.zeros((4, n_pad), dtype=np.float32)
        sc_pad[:, :n] = sc
        cols.append(sc_pad)
        level_meta.append((n, off))
        off += n_pad
    total = off                                           # multiple of 128

    lane_tile = _choose_lane_tile(total)
    num_tiles = int(pl.cdiv(total, lane_tile))
    if num_tiles > 1 and num_tiles % 2 == 1:
        num_tiles += 1         # even tile count -> balanced v7x two-TC split
    total_pad = num_tiles * lane_tile

    shift4 = np.zeros((4, total_pad), dtype=np.float32)
    shift4[:, :total] = np.concatenate(cols, axis=1)
    shift8 = np.concatenate([shift4, shift4], axis=0)     # (8, total_pad)

    out = _anchor_forward(
        jnp.asarray(shift8),
        num_anchors=num_anchors,
        lane_tile=lane_tile,
        level_meta=tuple(level_meta),
        anchor_sizes=tuple(float(s) for s in anchor_sizes),
        aspect_ratios=tuple(float(r) for r in aspect_ratios))
    return list(out)


# ---------------------------------------------------------------------------
# Pure NumPy reference mirroring the PyTorch code, for verification.
# ---------------------------------------------------------------------------
def _numpy_reference(img_hw, feature_hw_list, anchor_sizes, aspect_ratios):
    img_h, img_w = img_hw
    sizes = np.asarray(anchor_sizes, dtype=np.float32)
    ratios = np.asarray(aspect_ratios, dtype=np.float32)
    h_ratios = np.sqrt(ratios)
    w_ratios = np.float32(1.0) / h_ratios
    hs = (h_ratios[:, None] * sizes[None, :]).reshape(-1)
    ws = (w_ratios[:, None] * sizes[None, :]).reshape(-1)
    base = np.round(np.stack([-hs, -ws, hs, ws], axis=1) / 2.0)
    outs = []
    for fh, fw in feature_hw_list:
        sh, sw = np.float32(img_h / fh), np.float32(img_w / fw)
        h_c = np.arange(fh, dtype=np.float32) * sh
        w_c = np.arange(fw, dtype=np.float32) * sw
        hh, ww = np.meshgrid(h_c, w_c, indexing="ij")
        hh = hh.reshape(-1)
        ww = ww.reshape(-1)
        anchor = (np.stack([hh, ww, hh, ww], axis=0).reshape(-1, 1, 4)
                  + base.reshape(1, -1, 4))
        outs.append(anchor.reshape(-1, 4).astype(np.float32))
    return outs


if __name__ == "__main__":
    key = jax.random.PRNGKey(0)
    k1, k2, k3 = jax.random.split(key, 3)

    # Small shapes: imgs NCHW (2,4,16,16); two NCHW feature maps.
    imgs = jax.random.normal(k1, (2, 4, 16, 16), dtype=jnp.float32)
    feat0 = jax.random.normal(k2, (2, 8, 8, 8), dtype=jnp.float32)
    feat1 = jax.random.normal(k3, (2, 8, 4, 4), dtype=jnp.float32)

    anchors = anchor_generator(imgs, [feat0, feat1])
    anchors = [jax.block_until_ready(a) for a in anchors]

    ref = _numpy_reference((16, 16), [(8, 8), (4, 4)],
                           ANCHOR_SIZES, ASPECT_RATIOS)
    for got, want in zip(anchors, ref):
        assert got.shape == want.shape, (got.shape, want.shape)
        np.testing.assert_allclose(np.asarray(got), want, rtol=1e-6, atol=1e-6)

    print("KERNEL_OK")
</pallas_src>

<mosaic_0001>
module attributes {stable_mosaic.version = 11 : i64} {
  func.func @_anchor_add_kernel(%arg0: i32, %arg1: memref<8x128xf32, #tpu.memory_space<vmem>>, %arg2: memref<40x1xf32, #tpu.memory_space<vmem>>, %arg3: memref<40x128xf32, #tpu.memory_space<vmem>>) attributes {dimension_semantics = [#tpu.dimension_semantics<parallel>], iteration_bounds = array<i64: 2>, scalar_prefetch = 0 : i64, scratch_operands = 0 : i64, tpu.core_type = #tpu.core_type<tc>, window_params = [{transform_indices = @transform_0, window_bounds = array<i64: 8, 128>}, {pipeline_mode = #tpu.pipeline_mode<synchronous>, transform_indices = @transform_1, window_bounds = array<i64: 40, 1>}, {transform_indices = @transform_2, window_bounds = array<i64: 40, 128>}]} {
    %c0 = arith.constant 0 : index
    %c0_0 = arith.constant 0 : index
    %0 = vector.load %arg1[%c0, %c0_0] : memref<8x128xf32, #tpu.memory_space<vmem>>, vector<8x128xf32>
    %c0_1 = arith.constant 0 : index
    %c0_2 = arith.constant 0 : index
    %1 = vector.load %arg2[%c0_1, %c0_2] : memref<40x1xf32, #tpu.memory_space<vmem>>, vector<8x1xf32>
    %2 = vector.broadcast %1 : vector<8x1xf32> to vector<8x128xf32>
    %3 = arith.addf %0, %2 : vector<8x128xf32>
    %c0_3 = arith.constant 0 : index
    %c0_4 = arith.constant 0 : index
    %4 = vector.load %arg3[%c0_3, %c0_4] : memref<40x128xf32, #tpu.memory_space<vmem>>, vector<8x128xf32>
    tpu.vector_store %arg3[%c0_3, %c0_4], %3 {strides = array<i32>} : memref<40x128xf32, #tpu.memory_space<vmem>>, vector<8x128xf32>,
    %c8 = arith.constant 8 : index
    %c0_5 = arith.constant 0 : index
    %5 = vector.load %arg2[%c8, %c0_5] : memref<40x1xf32, #tpu.memory_space<vmem>>, vector<8x1xf32>
    %6 = vector.broadcast %5 : vector<8x1xf32> to vector<8x128xf32>
    %7 = arith.addf %0, %6 : vector<8x128xf32>
    %c8_6 = arith.constant 8 : index
    %c0_7 = arith.constant 0 : index
    %8 = vector.load %arg3[%c8_6, %c0_7] : memref<40x128xf32, #tpu.memory_space<vmem>>, vector<8x128xf32>
    tpu.vector_store %arg3[%c8_6, %c0_7], %7 {strides = array<i32>} : memref<40x128xf32, #tpu.memory_space<vmem>>, vector<8x128xf32>,
    %c16 = arith.constant 16 : index
    %c0_8 = arith.constant 0 : index
    %9 = vector.load %arg2[%c16, %c0_8] : memref<40x1xf32, #tpu.memory_space<vmem>>, vector<8x1xf32>
    %10 = vector.broadcast %9 : vector<8x1xf32> to vector<8x128xf32>
    %11 = arith.addf %0, %10 : vector<8x128xf32>
    %c16_9 = arith.constant 16 : index
    %c0_10 = arith.constant 0 : index
    %12 = vector.load %arg3[%c16_9, %c0_10] : memref<40x128xf32, #tpu.memory_space<vmem>>, vector<8x128xf32>
    tpu.vector_store %arg3[%c16_9, %c0_10], %11 {strides = array<i32>} : memref<40x128xf32, #tpu.memory_space<vmem>>, vector<8x128xf32>,
    %c24 = arith.constant 24 : index
    %c0_11 = arith.constant 0 : index
    %13 = vector.load %arg2[%c24, %c0_11] : memref<40x1xf32, #tpu.memory_space<vmem>>, vector<8x1xf32>
    %14 = vector.broadcast %13 : vector<8x1xf32> to vector<8x128xf32>
    %15 = arith.addf %0, %14 : vector<8x128xf32>
    %c24_12 = arith.constant 24 : index
    %c0_13 = arith.constant 0 : index
    %16 = vector.load %arg3[%c24_12, %c0_13] : memref<40x128xf32, #tpu.memory_space<vmem>>, vector<8x128xf32>
    tpu.vector_store %arg3[%c24_12, %c0_13], %15 {strides = array<i32>} : memref<40x128xf32, #tpu.memory_space<vmem>>, vector<8x128xf32>,
    %c32 = arith.constant 32 : index
    %c0_14 = arith.constant 0 : index
    %17 = vector.load %arg2[%c32, %c0_14] : memref<40x1xf32, #tpu.memory_space<vmem>>, vector<8x1xf32>
    %18 = vector.broadcast %17 : vector<8x1xf32> to vector<8x128xf32>
    %19 = arith.addf %0, %18 : vector<8x128xf32>
    %c32_15 = arith.constant 32 : index
    %c0_16 = arith.constant 0 : index
    %20 = vector.load %arg3[%c32_15, %c0_16] : memref<40x128xf32, #tpu.memory_space<vmem>>, vector<8x128xf32>
    tpu.vector_store %arg3[%c32_15, %c0_16], %19 {strides = array<i32>} : memref<40x128xf32, #tpu.memory_space<vmem>>, vector<8x128xf32>,
    return
  }
  func.func @transform_0(%arg0: i32) -> (i32, i32) {
    %c0_i32 = arith.constant 0 : i32
    %c0_i32_0 = arith.constant 0 : i32
    return %c0_i32, %arg0 : i32, i32
  }
  func.func @transform_1(%arg0: i32) -> (i32, i32) {
    %c0_i32 = arith.constant 0 : i32
    %c0_i32_0 = arith.constant 0 : i32
    %c0_i32_1 = arith.constant 0 : i32
    return %c0_i32, %c0_i32_0 : i32, i32
  }
  func.func @transform_2(%arg0: i32) -> (i32, i32) {
    %c0_i32 = arith.constant 0 : i32
    %c0_i32_0 = arith.constant 0 : i32
    return %c0_i32, %arg0 : i32, i32
  }
}

</mosaic_0001>

<llo_original>
// kernel: _anchor_forward.1
$region0: #{_anchor_forward.1}
  #allocation0 [shape = 'u32[]', space=smem, size = 0x4, offset = 0x4, fixed_abs, tag = 'smem constant byte address 0x4 - core index']
  #allocation1 [shape = 'u32[144,128]{1,0:T(1,128)}', space=vmem, size = 0x12000, scoped, tag = 'internal scratch']
  %s0 = inlined_call_operand.hbm [shape: f32[8,256], index: 0, kind: input, shape index: {}]
  %s1 = inlined_call_operand.hbm [shape: f32[40,1], index: 1, kind: input, shape index: {}]
  %s2 = inlined_call_operand.vmem [shape: f32[40,256], index: 2, kind: output, shape index: {}]
  %s3 = sld [smem:[#allocation0]]
  $region83: #{_anchor_forward.1} parent=0
    _
  %s5 = ssub.s32 1, %s3
  %s6 = scalar_select 0, %s5, %s3
  $region1: #{_anchor_forward.1} parent=0
    #allocation2 [shape = 'u8[8192]{0}', space=vmem, size = 0x2000, scoped, tag = 'input window, operand 0']
    #allocation3 [shape = 's32[2]{0}', space=sflag, size = 0x8, scoped, tag = 'scoped memory for _anchor_forward.1']
    #allocation4 [shape = 'u8[20480]{0}', space=vmem, size = 0x5000, scoped, tag = 'input window, operand 1, single buffered']
    #allocation5 [shape = 's32[1]{0}', space=sflag, size = 0x4, scoped, tag = 'scoped memory for _anchor_forward.1']
    #allocation6 [shape = 'u8[40960]{0}', space=vmem, size = 0xa000, scoped, tag = 'output window, operand 0']
    %7 = vsyncpa [#allocation3], 0
    %s8 = scalar_lea.sflag [#allocation3], 1
    %9 = vsyncpa %s8, 0
    %10 = vsyncpa [#allocation5], 0
    loop: start=0, step=1, limit=4
    $region2: #{_anchor_forward.1} parent=1 // loop_pre_header
      _
    $region3: #{_anchor_forward.1} parent=1 // loop_header
      %s12 = sphi 0, %s16
      %p13 = scmp.ge.s32.totalorder %s12, 4
      %s22 = sphi 0, %s24
      %s25 = sphi 0, %s22
      %s26 = sphi 0, %s25
      %s42 = sphi 0, %s26
      %s46 = sphi 0, %s46
      %s48 = sphi 0, %s46
      %s49 = sphi 0, %s48
      %s63 = sphi 0, %s49
      %s69 = sphi 0, %s71
      %s72 = sphi 0, %s69
      %s73 = sphi 0, %s72
      %s89 = sphi 0, %s73
    $region4: #{_anchor_forward.1} parent=1 // loop_header_branch
      %15 = sbr.rel (%p13) target = $region8
    $region5: #{_anchor_forward.1} parent=1 // loop_body
      %s17 = ssub.s32 %s12, 1
      %s18 = ssub.s32 %s12, 2
      %s19 = sadd.s32 %s12, 1
      %s20 = ssub.s32 %s12, %s19
      %p21 = scmp.eq.s32.totalorder %s20, 0
      %s23 = sadd.s32 %s22, 1
      %s24 = scalar_select %p21, %s22, %s23
      %p27 = pneg %p21
      %p28 = scmp.eq.s32.totalorder %s12, 1
      %p29 = por %p27, %p28
      %p30 = scmp.ne.s32.totalorder %s22, %s25
      %p31 = scmp.eq.s32.totalorder %s12, 0
      %p32 = por %p30, %p31
      %p33 = scmp.ne.s32.totalorder %s22, %s25
      %p34 = scmp.eq.s32.totalorder %s17, 1
      %p35 = por %p33, %p34
      %p36 = scmp.ne.s32.totalorder %s25, %s26
      %p37 = scmp.eq.s32.totalorder %s17, 0
      %p38 = por %p36, %p37
      %p39 = scmp.ne.s32.totalorder %s25, %s26
      %p40 = scmp.eq.s32.totalorder %s18, 1
      %p41 = por %p39, %p40
      %p43 = scmp.ne.s32.totalorder %s26, %s42
      %p44 = scmp.eq.s32.totalorder %s18, 0
      %p45 = por %p43, %p44
      %s47 = sadd.s32 %s46, 1
      %p50 = scmp.eq.s32.totalorder %s12, 1
      %p51 = scmp.ne.s32.totalorder %s46, %s48
      %p52 = scmp.eq.s32.totalorder %s12, 0
      %p53 = por %p51, %p52
      %p54 = scmp.ne.s32.totalorder %s46, %s48
      %p55 = scmp.eq.s32.totalorder %s17, 1
      %p56 = por %p54, %p55
      %p57 = scmp.ne.s32.totalorder %s48, %s49
      %p58 = scmp.eq.s32.totalorder %s17, 0
      %p59 = por %p57, %p58
      %p60 = scmp.ne.s32.totalorder %s48, %s49
      %p61 = scmp.eq.s32.totalorder %s18, 1
      %p62 = por %p60, %p61
      %p64 = scmp.ne.s32.totalorder %s49, %s63
      %p65 = scmp.eq.s32.totalorder %s18, 0
      %p66 = por %p64, %p65
      %s67 = ssub.s32 %s12, %s19
      %p68 = scmp.eq.s32.totalorder %s67, 0
      %s70 = sadd.s32 %s69, 1
      %s71 = scalar_select %p68, %s69, %s70
      %p74 = pneg %p68
      %p75 = scmp.eq.s32.totalorder %s12, 1
      %p76 = por %p74, %p75
      %p77 = scmp.ne.s32.totalorder %s69, %s72
      %p78 = scmp.eq.s32.totalorder %s12, 0
      %p79 = por %p77, %p78
      %p80 = scmp.ne.s32.totalorder %s69, %s72
      %p81 = scmp.eq.s32.totalorder %s17, 1
      %p82 = por %p80, %p81
      %p83 = scmp.ne.s32.totalorder %s72, %s73
      %p84 = scmp.eq.s32.totalorder %s17, 0
      %p85 = por %p83, %p84
      %p86 = scmp.ne.s32.totalorder %s72, %s73
      %p87 = scmp.eq.s32.totalorder %s18, 1
      %p88 = por %p86, %p87
      %p90 = scmp.ne.s32.totalorder %s73, %s89
      %p91 = scmp.eq.s32.totalorder %s18, 0
      %p92 = por %p90, %p91
      %p93 = scmp.le.s32.totalorder 1, %s12
      %p94 = scmp.lt.s32.totalorder %s12, 3
      %p95 = pnand %p93, %p94
      %p96 = pneg %p95
      // Predicated region
      $region9: #{_anchor_forward.1} parent=5 // pred_check
        _
      $region10: #{_anchor_forward.1} parent=5 // pred_check_branch
        %98 = sbr.rel (%p95) target = $region12
      $region11: #{_anchor_forward.1} parent=5 // pred_region
        %s99 = ssub.s32 %s12, 1
        // Predicated region
        $region13: #{_anchor_forward.1} parent=11 // pred_check
          %p100 = pneg %p59
        $region14: #{_anchor_forward.1} parent=11 // pred_check_branch
          %102 = sbr.rel (%p100) target = $region16
        $region15: #{_anchor_forward.1} parent=11 // pred_region
          %s104 = ssub.s32 640, 640
          %105 = vsyncadd [#allocation5], %s104
          %s106 = sshll.u32 [#allocation4], 4
          %s107 = int_to_ptr.vmem [resolvable:$true] %s106
          %112 = dma.hbm_to_vmem [thread:$0]  %s1, 640, %s107, [#allocation5], 128, 128, 8
        $region16: #{_anchor_forward.1} parent=11 // pred_fallthru
          _
      $region12: #{_anchor_forward.1} parent=5 // pred_fallthru
        _
      %p113 = scmp.lt.s32.totalorder %s12, 2
      // Predicated region
      $region17: #{_anchor_forward.1} parent=5 // pred_check
        %p114 = pneg %p113
      $region18: #{_anchor_forward.1} parent=5 // pred_check_branch
        %116 = sbr.rel (%p114) target = $region20
      $region19: #{_anchor_forward.1} parent=5 // pred_region
        // Predicated region
        $region21: #{_anchor_forward.1} parent=19 // pred_check
          %p117 = pneg %p32
        $region22: #{_anchor_forward.1} parent=19 // pred_check_branch
          %119 = sbr.rel (%p117) target = $region24
        $region23: #{_anchor_forward.1} parent=19 // pred_region
          %s120 = sand.u32 %s22, 1
          %s121 = scalar_lea.sflag [#allocation3], %s120
          %s122 = sand.u32 %s22, 1
          %s123 = smul.addr %s122, 8
          %s124 = scalar_lea.vmem [#allocation2], %s123
          %s126 = ssub.s32 128, 128
          %127 = vsyncadd %s121, %s126
          %s128 = smul.addr %s12, 128
          %s129 = scalar_lea.hbm %s0, %s128
          %s131 = sshll.u32 %s124, 4
          %s132 = int_to_ptr.vmem [resolvable:$true] %s131
          %134 = dma.hbm_to_vmem [thread:$0]  %s129, 128, %s132, %s121
        $region24: #{_anchor_forward.1} parent=19 // pred_fallthru
          _
      $region20: #{_anchor_forward.1} parent=5 // pred_fallthru
        _
      %p135 = scmp.le.s32.totalorder 1, %s12
      %p136 = scmp.lt.s32.totalorder %s12, 3
      %p137 = pnand %p135, %p136
      %p138 = pneg %p137
      // Predicated region
      $region25: #{_anchor_forward.1} parent=5 // pred_check
        _
      $region26: #{_anchor_forward.1} parent=5 // pred_check_branch
        %140 = sbr.rel (%p137) target = $region28
      $region27: #{_anchor_forward.1} parent=5 // pred_region
        %s141 = ssub.s32 %s12, 1
        %s142 = sand.u32 %s25, 1
        %s143 = scalar_lea.sflag [#allocation3], %s142
        %s144 = sand.u32 %s25, 1
        %s145 = smul.addr %s144, 8
        %s146 = scalar_lea.vmem [#allocation2], %s145
        // Predicated region
        $region29: #{_anchor_forward.1} parent=27 // pred_check
          %p147 = pneg %p38
        $region30: #{_anchor_forward.1} parent=27 // pred_check_branch
          %149 = sbr.rel (%p147) target = $region32
        $region31: #{_anchor_forward.1} parent=27 // pred_region
          %150 = dma.done %s143, 128
        $region32: #{_anchor_forward.1} parent=27 // pred_fallthru
          _
        // Predicated region
        $region33: #{_anchor_forward.1} parent=27 // pred_check
          %p151 = pneg %p59
        $region34: #{_anchor_forward.1} parent=27 // pred_check_branch
          %153 = sbr.rel (%p151) target = $region36
        $region35: #{_anchor_forward.1} parent=27 // pred_region
          %154 = dma.done [#allocation5], 640
        $region36: #{_anchor_forward.1} parent=27 // pred_fallthru
          _
        %s155 = sand.u32 %s25, 1
        %s156 = scalar_lea.sflag [#allocation3], %s155
        %s157 = sand.u32 %s25, 1
        %s158 = smul.addr %s157, 8
        %s159 = scalar_lea.vmem [#allocation2], %s158
        %p160 = pneg %p38
        %p161 = pneg %p35
        %p162 = pneg %p59
        %p163 = pneg %p56
        %p164 = pneg %p85
        %p165 = pneg %p82
        %s166 = sand.u32 %s72, 1
        %s167 = sand.u32 %s72, 1
        %s168 = smul.addr %s167, 40
        %s169 = scalar_lea.vmem [#allocation6], %s168
        %v170 = vld [vmem:[%s146] sm:$0xff]
        %v171 = vld [vmem:[#allocation4] sm:$0xff]
        %173 = vset.pattern.permute.xlu0 0
        %174 = vperm.xlu0 %173, %v171
        %v175 = vpop.permute.xlu0 %174
        %v177 = vadd.f32 %v170, %v175
        %178 = vst [vmem:[%s169] sm:$0xff] %v177
        %v179 = vld [vmem:[#allocation4 + $0x8] sm:$0xff]
        %181 = vset.pattern.permute.xlu0 0
        %182 = vperm.xlu0 %181, %v179
        %v183 = vpop.permute.xlu0 %182
        %v185 = vadd.f32 %v170, %v183
        %186 = vst [vmem:[%s169 + $0x8] sm:$0xff] %v185
        %v187 = vld [vmem:[#allocation4 + $0x10] sm:$0xff]
        %189 = vset.pattern.permute.xlu0 0
        %190 = vperm.xlu0 %189, %v187
        %v191 = vpop.permute.xlu0 %190
        %v193 = vadd.f32 %v170, %v191
        %194 = vst [vmem:[%s169 + $0x10] sm:$0xff] %v193
        %v195 = vld [vmem:[#allocation4 + $0x18] sm:$0xff]
        %197 = vset.pattern.permute.xlu0 0
        %198 = vperm.xlu0 %197, %v195
        %v199 = vpop.permute.xlu0 %198
        %v201 = vadd.f32 %v170, %v199
        %202 = vst [vmem:[%s169 + $0x18] sm:$0xff] %v201
        %v203 = vld [vmem:[#allocation4 + $0x20] sm:$0xff]
        %205 = vset.pattern.permute.xlu0 0
        %206 = vperm.xlu0 %205, %v203
        %v207 = vpop.permute.xlu0 %206
        %v209 = vadd.f32 %v170, %v207
        %210 = vst [vmem:[%s169 + $0x20] sm:$0xff] %v209
        %s211 = sand.u32 %s72, 1
        %s212 = sand.u32 %s72, 1
        %s213 = smul.addr %s212, 40
        %s214 = scalar_lea.vmem [#allocation6], %s213
        // Predicated region
        $region37: #{_anchor_forward.1} parent=27 // pred_check
          %p215 = pneg %p82
        $region38: #{_anchor_forward.1} parent=27 // pred_check_branch
          %217 = sbr.rel (%p215) target = $region40
        $region39: #{_anchor_forward.1} parent=27 // pred_region
          %s218 = smul.addr %s17, 8
          %s219 = scalar_lea.vmem %s2, %s218
          // Predicated region
          $region41: #{_anchor_forward.1} parent=39 // pred_check
            _
          $region42: #{_anchor_forward.1} parent=39 // pred_check_branch
            %221 = sbr.rel (0) target = $region44
          $region43: #{_anchor_forward.1} parent=39 // pred_region
            // Predicated region
            $region45: #{_anchor_forward.1} parent=43 // pred_check
              _
            $region46: #{_anchor_forward.1} parent=43 // pred_check_branch
              %223 = sbr.rel (0) target = $region48
            $region47: #{_anchor_forward.1} parent=43 // pred_region
              // Predicated region
              $region60: #{_anchor_forward.1} parent=47 // pred_check
                _
              $region61: #{_anchor_forward.1} parent=47 // pred_check_branch
                %246 = sbr.rel (0) target = $region63
              $region62: #{_anchor_forward.1} parent=47 // pred_region
                loop: start=0, step=1, limit=1
                $region64: #{_anchor_forward.1} parent=62 // loop_pre_header
                  _
                $region65: #{_anchor_forward.1} parent=62 // loop_header
                  %s248 = sphi 0, %s252
                  %p249 = scmp.ge.s32.totalorder %s248, 1
                  %s253 = sphi %s214, %s214
                  %s254 = sphi %s219, %s219
                $region66: #{_anchor_forward.1} parent=62 // loop_header_branch
                  %251 = sbr.rel (%p249) target = $region70
                $region67: #{_anchor_forward.1} parent=62 // loop_body
                  %v255 = vld [vmem:[%s253] sm:$0xff]
                  %256 = vst [vmem:[%s254] sm:$0xff] %v255
                  %v257 = vld [vmem:[%s253 + $0x8] sm:$0xff]
                  %258 = vst [vmem:[%s254 + $0x10] sm:$0xff] %v257
                  %v259 = vld [vmem:[%s253 + $0x10] sm:$0xff]
                  %260 = vst [vmem:[%s254 + $0x20] sm:$0xff] %v259
                  %v261 = vld [vmem:[%s253 + $0x18] sm:$0xff]
                  %262 = vst [vmem:[%s254 + $0x30] sm:$0xff] %v261
                  %v263 = vld [vmem:[%s253 + $0x20] sm:$0xff]
                  %264 = vst [vmem:[%s254 + $0x40] sm:$0xff] %v263
                $region68: #{_anchor_forward.1} parent=62 // loop_footer
                  %s252 = sadd.s32 1, %s248
                $region69: #{_anchor_forward.1} parent=62 // loop_footer_branch
                  %247 = sbr.rel target = $region65
                $region70: #{_anchor_forward.1} parent=62 // loop_exit
                  _
              $region63: #{_anchor_forward.1} parent=47 // pred_fallthru
                _
              // Predicated region
              $region71: #{_anchor_forward.1} parent=47 // pred_check
                _
              $region72: #{_anchor_forward.1} parent=47 // pred_check_branch
                %266 = sbr.rel target = $region74
              $region73: #{_anchor_forward.1} parent=47 // pred_region
                _
              $region74: #{_anchor_forward.1} parent=47 // pred_fallthru
                _
            $region48: #{_anchor_forward.1} parent=43 // pred_fallthru
              _
            // Predicated region
            $region49: #{_anchor_forward.1} parent=43 // pred_check
              _
            $region50: #{_anchor_forward.1} parent=43 // pred_check_branch
              %225 = sbr.rel target = $region52
            $region51: #{_anchor_forward.1} parent=43 // pred_region
              loop: start=0, step=1, limit=1
              $region53: #{_anchor_forward.1} parent=51 // loop_pre_header
                _
              $region54: #{_anchor_forward.1} parent=51 // loop_header
                %s228 = sphi 0, %s232
                %p229 = scmp.ge.s32.totalorder %s228, 1
                %s233 = sphi %s214, %s214
                %s234 = sphi %s219, %s219
              $region55: #{_anchor_forward.1} parent=51 // loop_header_branch
                %231 = sbr.rel (%p229) target = $region59
              $region56: #{_anchor_forward.1} parent=51 // loop_body
                %v235 = vld [vmem:[%s233] sm:$0xff]
                %236 = vst [vmem:[%s234] sm:$0xff] %v235
                %v237 = vld [vmem:[%s233 + $0x8] sm:$0xff]
                %238 = vst [vmem:[%s234 + $0x10] sm:$0xff] %v237
                %v239 = vld [vmem:[%s233 + $0x10] sm:$0xff]
                %240 = vst [vmem:[%s234 + $0x20] sm:$0xff] %v239
                %v241 = vld [vmem:[%s233 + $0x18] sm:$0xff]
                %242 = vst [vmem:[%s234 + $0x30] sm:$0xff] %v241
                %v243 = vld [vmem:[%s233 + $0x20] sm:$0xff]
                %244 = vst [vmem:[%s234 + $0x40] sm:$0xff] %v243
              $region57: #{_anchor_forward.1} parent=51 // loop_footer
                %s232 = sadd.s32 1, %s228
              $region58: #{_anchor_forward.1} parent=51 // loop_footer_branch
                %227 = sbr.rel target = $region54
              $region59: #{_anchor_forward.1} parent=51 // loop_exit
                _
            $region52: #{_anchor_forward.1} parent=43 // pred_fallthru
              _
          $region44: #{_anchor_forward.1} parent=39 // pred_fallthru
            _
          %267 = vnop
        $region40: #{_anchor_forward.1} parent=27 // pred_fallthru
          _
      $region28: #{_anchor_forward.1} parent=5 // pred_fallthru
        _
      %p268 = scmp.le.s32.totalorder 2, %s12
      // Predicated region
      $region75: #{_anchor_forward.1} parent=5 // pred_check
        %p269 = pneg %p268
      $region76: #{_anchor_forward.1} parent=5 // pred_check_branch
        %271 = sbr.rel (%p269) target = $region78
      $region77: #{_anchor_forward.1} parent=5 // pred_region
        %s272 = ssub.s32 %s12, 2
        // Predicated region
        $region79: #{_anchor_forward.1} parent=77 // pred_check
          %p273 = pneg %p88
        $region80: #{_anchor_forward.1} parent=77 // pred_check_branch
          %275 = sbr.rel (%p273) target = $region82
        $region81: #{_anchor_forward.1} parent=77 // pred_region
          %s276 = sand.u32 %s73, 1
          %s277 = sand.u32 %s73, 1
          %s278 = smul.addr %s277, 40
          %s279 = scalar_lea.vmem [#allocation6], %s278
        $region82: #{_anchor_forward.1} parent=77 // pred_fallthru
          _
      $region78: #{_anchor_forward.1} parent=5 // pred_fallthru
        _
    $region6: #{_anchor_forward.1} parent=1 // loop_footer
      %s16 = sadd.s32 1, %s12
    $region7: #{_anchor_forward.1} parent=1 // loop_footer_branch
      %11 = sbr.rel target = $region3
    $region8: #{_anchor_forward.1} parent=1 // loop_exit
      _
    %280 = vsyncpa [#allocation3], 1
    %s281 = scalar_lea.sflag [#allocation3], 1
    %282 = vsyncpa %s281, 1
    %283 = vsyncpa [#allocation5], 1

</llo_original>
